<compile_context>
chip_gen: v5e
topology: v5e:2x2
jax: 0.10.0
libtpu: 0.0.40
codegen_flags: <defaults>
</compile_context>

<pallas_src>
import jax
import jax.numpy as jnp
from jax.experimental import pallas as pl
from jax.experimental.pallas import tpu as pltpu


def _ca_kernel(x_ref, w1t_ref, b1_ref, w2t_ref, b2_ref, o_ref):
    # x_ref: (TB, C, HW)   w1t_ref: (C, Cr)  b1_ref: (1, Cr)
    # w2t_ref: (Cr, C)     b2_ref: (1, C)    o_ref: (TB, C, HW)
    x = x_ref[...]
    # AdaptiveAvgPool2d(1): mean over spatial, accumulate in f32.
    pooled = jnp.mean(x.astype(jnp.float32), axis=-1)          # (TB, C)
    # 1x1 conv #1 (C -> Cr) + bias + ReLU, lane-dense output.
    y1 = jnp.dot(pooled, w1t_ref[...],
                 preferred_element_type=jnp.float32) + b1_ref[...]
    y1 = jnp.maximum(y1, 0.0)                                   # (TB, Cr)
    # 1x1 conv #2 (Cr -> C) + bias + sigmoid.
    y2 = jnp.dot(y1, w2t_ref[...],
                 preferred_element_type=jnp.float32) + b2_ref[...]
    scale = jax.nn.sigmoid(y2)                                  # (TB, C)
    # Per-channel rescale of the input slab (broadcast over spatial lanes).
    o_ref[...] = x * scale[:, :, None].astype(x.dtype)


def _choose_block_batch(N, C, HW, itemsize):
    """Largest batch block that keeps slabs VMEM-safe and the grid >= 2 steps."""
    max_slab_bytes = 12 * 1024 * 1024        # ~48 MiB with in+out double-buffering (v7x-safe)
    per_batch = max(C * HW * itemsize, 1)
    cap = max(1, max_slab_bytes // per_batch)
    tb = 1
    for cand in range(1, N + 1):
        if N % cand:
            continue
        if cand > cap:
            break
        if N // cand >= 2 or N == 1:          # keep >=2 parallel steps for v7x megacore
            tb = cand
    return tb


def ca_layer(x, w1, b1, w2, b2):
    """x: (N, C, H, W).  w1: (Cr, C), b1: (Cr,), w2: (C, Cr), b2: (C,)."""
    N, C, H, W = x.shape
    Cr = w1.shape[0]
    HW = H * W
    itemsize = jnp.dtype(x.dtype).itemsize

    x_flat = x.reshape(N, C, HW)
    # Pre-transposed weights / row-vector biases (layout plumbing in the wrapper).
    w1_t = jnp.transpose(w1)                  # (C, Cr)
    w2_t = jnp.transpose(w2)                  # (Cr, C)
    b1_row = b1.reshape(1, Cr)
    b2_row = b2.reshape(1, C)

    TB = _choose_block_batch(N, C, HW, itemsize)
    grid = (N // TB,)

    block_bytes = TB * C * HW * itemsize
    weight_bytes = (w1_t.size + w2_t.size + b1_row.size + b2_row.size) * 4
    # 2x(in + out) double-buffered blocks + weights + slack; clamp to sane range.
    vmem_limit = int(min(100 * 2**20,
                         max(4 * block_bytes + weight_bytes + 2 * 2**20,
                             16 * 2**20)))

    out_flat = pl.pallas_call(
        _ca_kernel,
        out_shape=jax.ShapeDtypeStruct((N, C, HW), x.dtype),
        grid_spec=pltpu.PrefetchScalarGridSpec(
            num_scalar_prefetch=0,
            grid=grid,
            in_specs=[
                pl.BlockSpec((TB, C, HW), lambda n: (n, 0, 0)),  # x
                pl.BlockSpec((C, Cr), lambda n: (0, 0)),         # w1^T
                pl.BlockSpec((1, Cr), lambda n: (0, 0)),         # b1 row
                pl.BlockSpec((Cr, C), lambda n: (0, 0)),         # w2^T
                pl.BlockSpec((1, C), lambda n: (0, 0)),          # b2 row
            ],
            out_specs=pl.BlockSpec((TB, C, HW), lambda n: (n, 0, 0)),
        ),
        compiler_params=pltpu.CompilerParams(
            dimension_semantics=("parallel",),
            vmem_limit_bytes=vmem_limit,
        ),
    )(x_flat, w1_t, b1_row, w2_t, b2_row)

    return out_flat.reshape(N, C, H, W)


def ca_layer_ref(x, w1, b1, w2, b2):
    """Plain-JAX reference matching the PyTorch forward."""
    pooled = jnp.mean(x.astype(jnp.float32), axis=(2, 3))       # (N, C)
    y1 = jnp.maximum(pooled @ w1.T + b1, 0.0)                   # (N, Cr)
    y2 = jax.nn.sigmoid(y1 @ w2.T + b2)                         # (N, C)
    return x * y2[:, :, None, None].astype(x.dtype)


if __name__ == "__main__":
    # Small shapes consistent with the module (reduction=16 => channel >= 16).
    N, C, H, W = 4, 64, 16, 16          # HW = 256 (128-multiple -> lane-dense stores)
    reduction = 16
    Cr = C // reduction

    key = jax.random.PRNGKey(0)
    kx, kw1, kb1, kw2, kb2 = jax.random.split(key, 5)

    x = jax.random.normal(kx, (N, C, H, W), dtype=jnp.float32)
    # 1x1 conv weights squeezed to 2-D (out_ch, in_ch).
    w1 = jax.random.normal(kw1, (Cr, C), dtype=jnp.float32) * 0.1   # conv1 weight
    b1 = jax.random.normal(kb1, (Cr,), dtype=jnp.float32) * 0.1     # conv1 bias
    w2 = jax.random.normal(kw2, (C, Cr), dtype=jnp.float32) * 0.1   # conv2 weight
    b2 = jax.random.normal(kb2, (C,), dtype=jnp.float32) * 0.1      # conv2 bias

    out = ca_layer(x, w1, b1, w2, b2)
    out = jax.block_until_ready(out)

    ref = ca_layer_ref(x, w1, b1, w2, b2)
    assert out.shape == (N, C, H, W)
    assert jnp.allclose(out, ref, atol=1e-5, rtol=1e-5), "mismatch vs reference"

    print("KERNEL_OK")
</pallas_src>

<mosaic_0001>
module attributes {stable_mosaic.version = 11 : i64} {
  func.func @_ca_kernel(%arg0: i32, %arg1: memref<2x64x256xf32, #tpu.memory_space<vmem>>, %arg2: memref<64x4xf32, #tpu.memory_space<vmem>>, %arg3: memref<1x4xf32, #tpu.memory_space<vmem>>, %arg4: memref<4x64xf32, #tpu.memory_space<vmem>>, %arg5: memref<1x64xf32, #tpu.memory_space<vmem>>, %arg6: memref<2x64x256xf32, #tpu.memory_space<vmem>>) attributes {dimension_semantics = [#tpu.dimension_semantics<parallel>], iteration_bounds = array<i64: 2>, scalar_prefetch = 0 : i64, scratch_operands = 0 : i64, tpu.core_type = #tpu.core_type<tc>, window_params = [{transform_indices = @transform_0, window_bounds = array<i64: 2, 64, 256>}, {pipeline_mode = #tpu.pipeline_mode<synchronous>, transform_indices = @transform_1, window_bounds = array<i64: 64, 4>}, {pipeline_mode = #tpu.pipeline_mode<synchronous>, transform_indices = @transform_2, window_bounds = array<i64: 1, 4>}, {pipeline_mode = #tpu.pipeline_mode<synchronous>, transform_indices = @transform_3, window_bounds = array<i64: 4, 64>}, {pipeline_mode = #tpu.pipeline_mode<synchronous>, transform_indices = @transform_4, window_bounds = array<i64: 1, 64>}, {transform_indices = @transform_5, window_bounds = array<i64: 2, 64, 256>}]} {
    %c0 = arith.constant 0 : index
    %c0_0 = arith.constant 0 : index
    %c0_1 = arith.constant 0 : index
    %0 = vector.load %arg1[%c0, %c0_0, %c0_1] : memref<2x64x256xf32, #tpu.memory_space<vmem>>, vector<2x64x256xf32>
    %cst = arith.constant dense<0.000000e+00> : vector<2x64xf32>
    %1 = vector.multi_reduction <add>, %0, %cst [2] : vector<2x64x256xf32> to vector<2x64xf32>
    %cst_2 = arith.constant 2.560000e+02 : f32
    %2 = vector.broadcast %cst_2 : f32 to vector<2x64xf32>
    %3 = arith.divf %1, %2 : vector<2x64xf32>
    %c0_3 = arith.constant 0 : index
    %c0_4 = arith.constant 0 : index
    %4 = vector.load %arg2[%c0_3, %c0_4] : memref<64x4xf32, #tpu.memory_space<vmem>>, vector<64x4xf32>
    %cst_5 = arith.constant dense<0.000000e+00> : vector<2x4xf32>
    %5 = tpu.matmul %3, %4, %cst_5 {dimension_numbers = #tpu.dot_dimension_numbers<[1], [0], [0], [1], [0, 0, 1, 1], [], []>} : vector<2x64xf32>, vector<64x4xf32>, vector<2x4xf32> -> vector<2x4xf32>
    %c0_6 = arith.constant 0 : index
    %c0_7 = arith.constant 0 : index
    %6 = vector.load %arg3[%c0_6, %c0_7] : memref<1x4xf32, #tpu.memory_space<vmem>>, vector<1x4xf32>
    %7 = vector.broadcast %6 : vector<1x4xf32> to vector<2x4xf32>
    %8 = arith.addf %5, %7 : vector<2x4xf32>
    %cst_8 = arith.constant 0.000000e+00 : f32
    %9 = vector.broadcast %cst_8 : f32 to vector<2x4xf32>
    %10 = arith.maximumf %8, %9 : vector<2x4xf32>
    %c0_9 = arith.constant 0 : index
    %c0_10 = arith.constant 0 : index
    %11 = vector.load %arg4[%c0_9, %c0_10] : memref<4x64xf32, #tpu.memory_space<vmem>>, vector<4x64xf32>
    %cst_11 = arith.constant dense<0.000000e+00> : vector<2x64xf32>
    %12 = tpu.matmul %10, %11, %cst_11 {dimension_numbers = #tpu.dot_dimension_numbers<[1], [0], [0], [1], [0, 0, 1, 1], [], []>} : vector<2x4xf32>, vector<4x64xf32>, vector<2x64xf32> -> vector<2x64xf32>
    %c0_12 = arith.constant 0 : index
    %c0_13 = arith.constant 0 : index
    %13 = vector.load %arg5[%c0_12, %c0_13] : memref<1x64xf32, #tpu.memory_space<vmem>>, vector<1x64xf32>
    %14 = vector.broadcast %13 : vector<1x64xf32> to vector<2x64xf32>
    %15 = arith.addf %12, %14 : vector<2x64xf32>
    %16 = arith.negf %15 : vector<2x64xf32>
    %17 = math.exp %16 : vector<2x64xf32>
    %cst_14 = arith.constant 1.000000e+00 : f32
    %18 = vector.broadcast %cst_14 : f32 to vector<2x64xf32>
    %19 = arith.addf %18, %17 : vector<2x64xf32>
    %20 = arith.divf %18, %19 : vector<2x64xf32>
    %21 = vector.shape_cast %20 : vector<2x64xf32> to vector<2x64x1xf32>
    %22 = vector.broadcast %21 : vector<2x64x1xf32> to vector<2x64x256xf32>
    %23 = arith.mulf %0, %22 : vector<2x64x256xf32>
    %c0_15 = arith.constant 0 : index
    %c0_16 = arith.constant 0 : index
    %c0_17 = arith.constant 0 : index
    %24 = vector.load %arg6[%c0_15, %c0_16, %c0_17] : memref<2x64x256xf32, #tpu.memory_space<vmem>>, vector<2x64x256xf32>
    tpu.vector_store %arg6[%c0_15, %c0_16, %c0_17], %23 {strides = array<i32>} : memref<2x64x256xf32, #tpu.memory_space<vmem>>, vector<2x64x256xf32>,
    return
  }
  func.func @transform_0(%arg0: i32) -> (i32, i32, i32) {
    %c0_i32 = arith.constant 0 : i32
    %c0_i32_0 = arith.constant 0 : i32
    %c0_i32_1 = arith.constant 0 : i32
    return %arg0, %c0_i32, %c0_i32_0 : i32, i32, i32
  }
  func.func @transform_1(%arg0: i32) -> (i32, i32) {
    %c0_i32 = arith.constant 0 : i32
    %c0_i32_0 = arith.constant 0 : i32
    %c0_i32_1 = arith.constant 0 : i32
    return %c0_i32, %c0_i32_0 : i32, i32
  }
  func.func @transform_2(%arg0: i32) -> (i32, i32) {
    %c0_i32 = arith.constant 0 : i32
    %c0_i32_0 = arith.constant 0 : i32
    %c0_i32_1 = arith.constant 0 : i32
    return %c0_i32, %c0_i32_0 : i32, i32
  }
  func.func @transform_3(%arg0: i32) -> (i32, i32) {
    %c0_i32 = arith.constant 0 : i32
    %c0_i32_0 = arith.constant 0 : i32
    %c0_i32_1 = arith.constant 0 : i32
    return %c0_i32, %c0_i32_0 : i32, i32
  }
  func.func @transform_4(%arg0: i32) -> (i32, i32) {
    %c0_i32 = arith.constant 0 : i32
    %c0_i32_0 = arith.constant 0 : i32
    %c0_i32_1 = arith.constant 0 : i32
    return %c0_i32, %c0_i32_0 : i32, i32
  }
  func.func @transform_5(%arg0: i32) -> (i32, i32, i32) {
    %c0_i32 = arith.constant 0 : i32
    %c0_i32_0 = arith.constant 0 : i32
    %c0_i32_1 = arith.constant 0 : i32
    return %arg0, %c0_i32, %c0_i32_0 : i32, i32, i32
  }
}

</mosaic_0001>

<llo_original>
// kernel: tpu_custom_call.1
$region0: #{tpu_custom_call.1}
  #allocation0 [shape = 'u32[]', space=smem, size = 0x4, offset = 0x4, fixed_abs, tag = 'smem constant byte address 0x4 - core index']
  #allocation1 [shape = 'u32[72,128]{1,0:T(1,128)}', space=vmem, size = 0x9000, scoped, tag = 'internal scratch']
  %s0 = inlined_call_operand.hbm [shape: f32[4,64,256], index: 0, kind: input, shape index: {}]
  %s1 = inlined_call_operand.vmem [shape: f32[64,4], index: 1, kind: input, shape index: {}]
  %s2 = inlined_call_operand.vmem [shape: f32[1,4], index: 2, kind: input, shape index: {}]
  %s3 = inlined_call_operand.vmem [shape: f32[4,64], index: 3, kind: input, shape index: {}]
  %s4 = inlined_call_operand.vmem [shape: f32[1,64], index: 4, kind: input, shape index: {}]
  %s5 = inlined_call_operand.hbm [shape: f32[4,64,256], index: 5, kind: output, shape index: {}]
  %s6 = sld [smem:[#allocation0]]
  $region57: #{tpu_custom_call.1} parent=0
    _
  %s8 = ssub.s32 1, %s6
  %s9 = scalar_select 0, %s8, %s6
  $region1: #{tpu_custom_call.1} parent=0
    #allocation2 [shape = 'u8[262144]{0}', space=vmem, size = 0x40000, scoped, tag = 'input window, operand 0']
    #allocation3 [shape = 's32[2]{0}', space=sflag, size = 0x8, scoped, tag = 'scoped memory for tpu_custom_call.1']
    #allocation4 [shape = 's32[2]{0}', space=sflag, size = 0x8, scoped, tag = 'scoped memory for tpu_custom_call.1']
    #allocation5 [shape = 'u8[262144]{0}', space=vmem, size = 0x40000, scoped, tag = 'output window, operand 0']
    %10 = vsyncpa [#allocation3], 0
    %s11 = scalar_lea.sflag [#allocation3], 1
    %12 = vsyncpa %s11, 0
    %13 = vsyncpa [#allocation4], 0
    %s14 = scalar_lea.sflag [#allocation4], 1
    %15 = vsyncpa %s14, 0
    loop: start=0, step=1, limit=4
    $region2: #{tpu_custom_call.1} parent=1 // loop_pre_header
      _
    $region3: #{tpu_custom_call.1} parent=1 // loop_header
      %s17 = sphi 0, %s21
      %p18 = scmp.ge.s32.totalorder %s17, 4
      %s27 = sphi 0, %s29
      %s30 = sphi 0, %s27
      %s31 = sphi 0, %s30
      %s47 = sphi 0, %s31
      %s51 = sphi 0, %s51
      %s53 = sphi 0, %s51
      %s54 = sphi 0, %s53
      %s68 = sphi 0, %s54
      %s72 = sphi 0, %s72
      %s74 = sphi 0, %s72
      %s75 = sphi 0, %s74
      %s89 = sphi 0, %s75
      %s93 = sphi 0, %s93
      %s95 = sphi 0, %s93
      %s96 = sphi 0, %s95
      %s110 = sphi 0, %s96
      %s114 = sphi 0, %s114
      %s116 = sphi 0, %s114
      %s117 = sphi 0, %s116
      %s131 = sphi 0, %s117
      %s137 = sphi 0, %s139
      %s140 = sphi 0, %s137
      %s141 = sphi 0, %s140
      %s157 = sphi 0, %s141
    $region4: #{tpu_custom_call.1} parent=1 // loop_header_branch
      %20 = sbr.rel (%p18) target = $region8
    $region5: #{tpu_custom_call.1} parent=1 // loop_body
      %s22 = ssub.s32 %s17, 1
      %s23 = ssub.s32 %s17, 2
      %s24 = sadd.s32 %s17, 1
      %s25 = ssub.s32 %s17, %s24
      %p26 = scmp.eq.s32.totalorder %s25, 0
      %s28 = sadd.s32 %s27, 1
      %s29 = scalar_select %p26, %s27, %s28
      %p32 = pneg %p26
      %p33 = scmp.eq.s32.totalorder %s17, 1
      %p34 = por %p32, %p33
      %p35 = scmp.ne.s32.totalorder %s27, %s30
      %p36 = scmp.eq.s32.totalorder %s17, 0
      %p37 = por %p35, %p36
      %p38 = scmp.ne.s32.totalorder %s27, %s30
      %p39 = scmp.eq.s32.totalorder %s22, 1
      %p40 = por %p38, %p39
      %p41 = scmp.ne.s32.totalorder %s30, %s31
      %p42 = scmp.eq.s32.totalorder %s22, 0
      %p43 = por %p41, %p42
      %p44 = scmp.ne.s32.totalorder %s30, %s31
      %p45 = scmp.eq.s32.totalorder %s23, 1
      %p46 = por %p44, %p45
      %p48 = scmp.ne.s32.totalorder %s31, %s47
      %p49 = scmp.eq.s32.totalorder %s23, 0
      %p50 = por %p48, %p49
      %s52 = sadd.s32 %s51, 1
      %p55 = scmp.eq.s32.totalorder %s17, 1
      %p56 = scmp.ne.s32.totalorder %s51, %s53
      %p57 = scmp.eq.s32.totalorder %s17, 0
      %p58 = por %p56, %p57
      %p59 = scmp.ne.s32.totalorder %s51, %s53
      %p60 = scmp.eq.s32.totalorder %s22, 1
      %p61 = por %p59, %p60
      %p62 = scmp.ne.s32.totalorder %s53, %s54
      %p63 = scmp.eq.s32.totalorder %s22, 0
      %p64 = por %p62, %p63
      %p65 = scmp.ne.s32.totalorder %s53, %s54
      %p66 = scmp.eq.s32.totalorder %s23, 1
      %p67 = por %p65, %p66
      %p69 = scmp.ne.s32.totalorder %s54, %s68
      %p70 = scmp.eq.s32.totalorder %s23, 0
      %p71 = por %p69, %p70
      %s73 = sadd.s32 %s72, 1
      %p76 = scmp.eq.s32.totalorder %s17, 1
      %p77 = scmp.ne.s32.totalorder %s72, %s74
      %p78 = scmp.eq.s32.totalorder %s17, 0
      %p79 = por %p77, %p78
      %p80 = scmp.ne.s32.totalorder %s72, %s74
      %p81 = scmp.eq.s32.totalorder %s22, 1
      %p82 = por %p80, %p81
      %p83 = scmp.ne.s32.totalorder %s74, %s75
      %p84 = scmp.eq.s32.totalorder %s22, 0
      %p85 = por %p83, %p84
      %p86 = scmp.ne.s32.totalorder %s74, %s75
      %p87 = scmp.eq.s32.totalorder %s23, 1
      %p88 = por %p86, %p87
      %p90 = scmp.ne.s32.totalorder %s75, %s89
      %p91 = scmp.eq.s32.totalorder %s23, 0
      %p92 = por %p90, %p91
      %s94 = sadd.s32 %s93, 1
      %p97 = scmp.eq.s32.totalorder %s17, 1
      %p98 = scmp.ne.s32.totalorder %s93, %s95
      %p99 = scmp.eq.s32.totalorder %s17, 0
      %p100 = por %p98, %p99
      %p101 = scmp.ne.s32.totalorder %s93, %s95
      %p102 = scmp.eq.s32.totalorder %s22, 1
      %p103 = por %p101, %p102
      %p104 = scmp.ne.s32.totalorder %s95, %s96
      %p105 = scmp.eq.s32.totalorder %s22, 0
      %p106 = por %p104, %p105
      %p107 = scmp.ne.s32.totalorder %s95, %s96
      %p108 = scmp.eq.s32.totalorder %s23, 1
      %p109 = por %p107, %p108
      %p111 = scmp.ne.s32.totalorder %s96, %s110
      %p112 = scmp.eq.s32.totalorder %s23, 0
      %p113 = por %p111, %p112
      %s115 = sadd.s32 %s114, 1
      %p118 = scmp.eq.s32.totalorder %s17, 1
      %p119 = scmp.ne.s32.totalorder %s114, %s116
      %p120 = scmp.eq.s32.totalorder %s17, 0
      %p121 = por %p119, %p120
      %p122 = scmp.ne.s32.totalorder %s114, %s116
      %p123 = scmp.eq.s32.totalorder %s22, 1
      %p124 = por %p122, %p123
      %p125 = scmp.ne.s32.totalorder %s116, %s117
      %p126 = scmp.eq.s32.totalorder %s22, 0
      %p127 = por %p125, %p126
      %p128 = scmp.ne.s32.totalorder %s116, %s117
      %p129 = scmp.eq.s32.totalorder %s23, 1
      %p130 = por %p128, %p129
      %p132 = scmp.ne.s32.totalorder %s117, %s131
      %p133 = scmp.eq.s32.totalorder %s23, 0
      %p134 = por %p132, %p133
      %s135 = ssub.s32 %s17, %s24
      %p136 = scmp.eq.s32.totalorder %s135, 0
      %s138 = sadd.s32 %s137, 1
      %s139 = scalar_select %p136, %s137, %s138
      %p142 = pneg %p136
      %p143 = scmp.eq.s32.totalorder %s17, 1
      %p144 = por %p142, %p143
      %p145 = scmp.ne.s32.totalorder %s137, %s140
      %p146 = scmp.eq.s32.totalorder %s17, 0
      %p147 = por %p145, %p146
      %p148 = scmp.ne.s32.totalorder %s137, %s140
      %p149 = scmp.eq.s32.totalorder %s22, 1
      %p150 = por %p148, %p149
      %p151 = scmp.ne.s32.totalorder %s140, %s141
      %p152 = scmp.eq.s32.totalorder %s22, 0
      %p153 = por %p151, %p152
      %p154 = scmp.ne.s32.totalorder %s140, %s141
      %p155 = scmp.eq.s32.totalorder %s23, 1
      %p156 = por %p154, %p155
      %p158 = scmp.ne.s32.totalorder %s141, %s157
      %p159 = scmp.eq.s32.totalorder %s23, 0
      %p160 = por %p158, %p159
      %p161 = scmp.le.s32.totalorder 1, %s17
      %p162 = scmp.lt.s32.totalorder %s17, 3
      %p163 = pnand %p161, %p162
      %p164 = pneg %p163
      // Predicated region
      $region9: #{tpu_custom_call.1} parent=5 // pred_check
        _
      $region10: #{tpu_custom_call.1} parent=5 // pred_check_branch
        %166 = sbr.rel (%p163) target = $region12
      $region11: #{tpu_custom_call.1} parent=5 // pred_region
        %s167 = ssub.s32 %s17, 1
        // Predicated region
        $region13: #{tpu_custom_call.1} parent=11 // pred_check
          %p168 = pneg %p64
        $region14: #{tpu_custom_call.1} parent=11 // pred_check_branch
          %170 = sbr.rel (%p168) target = $region16
        $region15: #{tpu_custom_call.1} parent=11 // pred_region
          _
        $region16: #{tpu_custom_call.1} parent=11 // pred_fallthru
          _
        // Predicated region
        $region17: #{tpu_custom_call.1} parent=11 // pred_check
          %p171 = pneg %p85
        $region18: #{tpu_custom_call.1} parent=11 // pred_check_branch
          %173 = sbr.rel (%p171) target = $region20
        $region19: #{tpu_custom_call.1} parent=11 // pred_region
          _
        $region20: #{tpu_custom_call.1} parent=11 // pred_fallthru
          _
        // Predicated region
        $region21: #{tpu_custom_call.1} parent=11 // pred_check
          %p174 = pneg %p106
        $region22: #{tpu_custom_call.1} parent=11 // pred_check_branch
          %176 = sbr.rel (%p174) target = $region24
        $region23: #{tpu_custom_call.1} parent=11 // pred_region
          _
        $region24: #{tpu_custom_call.1} parent=11 // pred_fallthru
          _
        // Predicated region
        $region25: #{tpu_custom_call.1} parent=11 // pred_check
          %p177 = pneg %p127
        $region26: #{tpu_custom_call.1} parent=11 // pred_check_branch
          %179 = sbr.rel (%p177) target = $region28
        $region27: #{tpu_custom_call.1} parent=11 // pred_region
          _
        $region28: #{tpu_custom_call.1} parent=11 // pred_fallthru
          _
      $region12: #{tpu_custom_call.1} parent=5 // pred_fallthru
        _
      %p180 = scmp.lt.s32.totalorder %s17, 2
      // Predicated region
      $region29: #{tpu_custom_call.1} parent=5 // pred_check
        %p181 = pneg %p180
      $region30: #{tpu_custom_call.1} parent=5 // pred_check_branch
        %183 = sbr.rel (%p181) target = $region32
      $region31: #{tpu_custom_call.1} parent=5 // pred_region
        // Predicated region
        $region33: #{tpu_custom_call.1} parent=31 // pred_check
          %p184 = pneg %p37
        $region34: #{tpu_custom_call.1} parent=31 // pred_check_branch
          %186 = sbr.rel (%p184) target = $region36
        $region35: #{tpu_custom_call.1} parent=31 // pred_region
          %s187 = sand.u32 %s27, 1
          %s188 = scalar_lea.sflag [#allocation3], %s187
          %s189 = sand.u32 %s27, 1
          %s190 = smul.addr %s189, 256
          %s191 = scalar_lea.vmem [#allocation2], %s190
          %s192 = smul.u32 2, %s17
          %194 = vsyncadd %s188, 0
          %s195 = smul.addr %s192, 16
          %s196 = smul.addr %s195, 8
          %s197 = scalar_lea.hbm %s0, %s196
          %s198 = sshll.u32 %s197, 4
          %s199 = int_to_ptr.hbm [resolvable:$true] %s198
          %s200 = sshll.u32 %s191, 4
          %s201 = int_to_ptr.vmem [resolvable:$true] %s200
          %206 = dma.hbm_to_vmem [thread:$0]  %s199, 4096, %s201, %s188, 256, 256, 16
        $region36: #{tpu_custom_call.1} parent=31 // pred_fallthru
          _
      $region32: #{tpu_custom_call.1} parent=5 // pred_fallthru
        _
      %p207 = scmp.le.s32.totalorder 1, %s17
      %p208 = scmp.lt.s32.totalorder %s17, 3
      %p209 = pnand %p207, %p208
      %p210 = pneg %p209
      // Predicated region
      $region37: #{tpu_custom_call.1} parent=5 // pred_check
        _
      $region38: #{tpu_custom_call.1} parent=5 // pred_check_branch
        %212 = sbr.rel (%p209) target = $region40
      $region39: #{tpu_custom_call.1} parent=5 // pred_region
        %s213 = ssub.s32 %s17, 1
        %s214 = sand.u32 %s30, 1
        %s215 = scalar_lea.sflag [#allocation3], %s214
        %s216 = sand.u32 %s30, 1
        %s217 = smul.addr %s216, 256
        %s218 = scalar_lea.vmem [#allocation2], %s217
        // Predicated region
        $region41: #{tpu_custom_call.1} parent=39 // pred_check
          %p219 = pneg %p43
        $region42: #{tpu_custom_call.1} parent=39 // pred_check_branch
          %221 = sbr.rel (%p219) target = $region44
        $region43: #{tpu_custom_call.1} parent=39 // pred_region
          %223 = dma.done %s215, 4096
        $region44: #{tpu_custom_call.1} parent=39 // pred_fallthru
          _
        %s224 = sand.u32 %s30, 1
        %s225 = scalar_lea.sflag [#allocation3], %s224
        %s226 = sand.u32 %s30, 1
        %s227 = smul.addr %s226, 256
        %s228 = scalar_lea.vmem [#allocation2], %s227
        %p229 = pneg %p43
        %p230 = pneg %p40
        %p231 = pneg %p64
        %p232 = pneg %p61
        %p233 = pneg %p85
        %p234 = pneg %p82
        %p235 = pneg %p106
        %p236 = pneg %p103
        %p237 = pneg %p127
        %p238 = pneg %p124
        %p239 = pneg %p153
        %p240 = pneg %p150
        %s241 = sand.u32 %s140, 1
        %s242 = scalar_lea.sflag [#allocation4], %s241
        %s243 = sand.u32 %s140, 1
        %s244 = smul.addr %s243, 256
        %s245 = scalar_lea.vmem [#allocation5], %s244
        %s246 = smul.u32 2, %s22
        %s247 = smul.u32 2, %s22
        %v248 = vld [vmem:[%s218] sm:$0xff]
        %v249 = vld [vmem:[%s218 + $0x8] sm:$0xff]
        %v250 = vld [vmem:[%s218 + $0x10] sm:$0xff]
        %v251 = vld [vmem:[%s218 + $0x18] sm:$0xff]
        %v252 = vld [vmem:[%s218 + $0x20] sm:$0xff]
        %v253 = vld [vmem:[%s218 + $0x28] sm:$0xff]
        %v254 = vld [vmem:[%s218 + $0x30] sm:$0xff]
        %v255 = vld [vmem:[%s218 + $0x38] sm:$0xff]
        %v256 = vld [vmem:[%s218 + $0x40] sm:$0xff]
        %v257 = vld [vmem:[%s218 + $0x48] sm:$0xff]
        %v258 = vld [vmem:[%s218 + $0x50] sm:$0xff]
        %v259 = vld [vmem:[%s218 + $0x58] sm:$0xff]
        %v260 = vld [vmem:[%s218 + $0x60] sm:$0xff]
        %v261 = vld [vmem:[%s218 + $0x68] sm:$0xff]
        %v262 = vld [vmem:[%s218 + $0x70] sm:$0xff]
        %v263 = vld [vmem:[%s218 + $0x78] sm:$0xff]
        %v264 = vld [vmem:[%s218 + $0x80] sm:$0xff]
        %v265 = vld [vmem:[%s218 + $0x88] sm:$0xff]
        %v266 = vld [vmem:[%s218 + $0x90] sm:$0xff]
        %v267 = vld [vmem:[%s218 + $0x98] sm:$0xff]
        %v268 = vld [vmem:[%s218 + $0xa0] sm:$0xff]
        %v269 = vld [vmem:[%s218 + $0xa8] sm:$0xff]
        %v270 = vld [vmem:[%s218 + $0xb0] sm:$0xff]
        %v271 = vld [vmem:[%s218 + $0xb8] sm:$0xff]
        %v272 = vld [vmem:[%s218 + $0xc0] sm:$0xff]
        %v273 = vld [vmem:[%s218 + $0xc8] sm:$0xff]
        %v274 = vld [vmem:[%s218 + $0xd0] sm:$0xff]
        %v275 = vld [vmem:[%s218 + $0xd8] sm:$0xff]
        %v276 = vld [vmem:[%s218 + $0xe0] sm:$0xff]
        %v277 = vld [vmem:[%s218 + $0xe8] sm:$0xff]
        %v278 = vld [vmem:[%s218 + $0xf0] sm:$0xff]
        %v279 = vld [vmem:[%s218 + $0xf8] sm:$0xff]
        %v280 = vadd.f32 %v248, %v249
        %281 = vadd.xlane.f32.xlu0 %v280
        %v282 = vpop.xlane.xlu0 %281
        %v283 = vadd.f32 %v250, %v251
        %284 = vadd.xlane.f32.xlu0 %v283
        %v285 = vpop.xlane.xlu0 %284
        %v286 = vadd.f32 %v252, %v253
        %287 = vadd.xlane.f32.xlu0 %v286
        %v288 = vpop.xlane.xlu0 %287
        %v289 = vadd.f32 %v254, %v255
        %290 = vadd.xlane.f32.xlu0 %v289
        %v291 = vpop.xlane.xlu0 %290
        %v292 = vadd.f32 %v256, %v257
        %293 = vadd.xlane.f32.xlu0 %v292
        %v294 = vpop.xlane.xlu0 %293
        %v295 = vadd.f32 %v258, %v259
        %296 = vadd.xlane.f32.xlu0 %v295
        %v297 = vpop.xlane.xlu0 %296
        %v298 = vadd.f32 %v260, %v261
        %299 = vadd.xlane.f32.xlu0 %v298
        %v300 = vpop.xlane.xlu0 %299
        %v301 = vadd.f32 %v262, %v263
        %302 = vadd.xlane.f32.xlu0 %v301
        %v303 = vpop.xlane.xlu0 %302
        %v304 = vadd.f32 %v264, %v265
        %305 = vadd.xlane.f32.xlu0 %v304
        %v306 = vpop.xlane.xlu0 %305
        %v307 = vadd.f32 %v266, %v267
        %308 = vadd.xlane.f32.xlu0 %v307
        %v309 = vpop.xlane.xlu0 %308
        %v310 = vadd.f32 %v268, %v269
        %311 = vadd.xlane.f32.xlu0 %v310
        %v312 = vpop.xlane.xlu0 %311
        %v313 = vadd.f32 %v270, %v271
        %314 = vadd.xlane.f32.xlu0 %v313
        %v315 = vpop.xlane.xlu0 %314
        %v316 = vadd.f32 %v272, %v273
        %317 = vadd.xlane.f32.xlu0 %v316
        %v318 = vpop.xlane.xlu0 %317
        %v319 = vadd.f32 %v274, %v275
        %320 = vadd.xlane.f32.xlu0 %v319
        %v321 = vpop.xlane.xlu0 %320
        %v322 = vadd.f32 %v276, %v277
        %323 = vadd.xlane.f32.xlu0 %v322
        %v324 = vpop.xlane.xlu0 %323
        %v325 = vadd.f32 %v278, %v279
        %326 = vadd.xlane.f32.xlu0 %v325
        %v327 = vpop.xlane.xlu0 %326
        %v328 = vrcp.pop 256.0
        %v329 = vmul.f32 256.0, %v328
        %v330 = vsub.f32 1.0, %v329
        %v331 = vmul.f32 %v328, %v330
        %v332 = vadd.f32 %v328, %v331
        %vm333 = vweird.f32 %v328
        %v334 = vsel %vm333, %v328, %v332
        %v335 = vmul.f32 %v282, %v334
        %v336 = vmul.f32 %v285, %v334
        %v337 = vmul.f32 %v288, %v334
        %v338 = vmul.f32 %v291, %v334
        %v339 = vmul.f32 %v294, %v334
        %v340 = vmul.f32 %v297, %v334
        %v341 = vmul.f32 %v300, %v334
        %v342 = vmul.f32 %v303, %v334
        %v343 = vmul.f32 %v306, %v334
        %v344 = vmul.f32 %v309, %v334
        %v345 = vmul.f32 %v312, %v334
        %v346 = vmul.f32 %v315, %v334
        %v347 = vmul.f32 %v318, %v334
        %v348 = vmul.f32 %v321, %v334
        %v349 = vmul.f32 %v324, %v334
        %v350 = vmul.f32 %v327, %v334
        %v351 = vld [vmem:[%s1] sm:$0xff]
        %v352 = vld [vmem:[%s1 + $0x8] sm:$0xff]
        %v353 = vld [vmem:[%s1 + $0x10] sm:$0xff]
        %v354 = vld [vmem:[%s1 + $0x18] sm:$0xff]
        %v355 = vld [vmem:[%s1 + $0x20] sm:$0xff]
        %v356 = vld [vmem:[%s1 + $0x28] sm:$0xff]
        %v357 = vld [vmem:[%s1 + $0x30] sm:$0xff]
        %v358 = vld [vmem:[%s1 + $0x38] sm:$0xff]
        %v359 = vld [vmem:[%s2] sm:$0x1]
        %v361 = vperm.slane %v359, 0
        %v379 = vlaneseq
        %v380 = vand.u32 %v379, 127
        %v381 = vperm.slane %v335, %v380
        %v382 = vadd.s32 %v380, 4294967288
        %v383 = vperm.slane %v336, %v382
        %vm384 = vcmask 130112
        %v385 = vsel %vm384, %v383, %v381
        %v386 = vadd.s32 %v380, 4294967280
        %v387 = vperm.slane %v337, %v386
        %vm388 = vcmask 195712
        %v389 = vsel %vm388, %v387, %v385
        %v390 = vadd.s32 %v380, 4294967272
        %v391 = vperm.slane %v338, %v390
        %vm392 = vcmask 261312
        %v393 = vsel %vm392, %v391, %v389
        %v394 = vadd.s32 %v380, 4294967264
        %v395 = vperm.slane %v339, %v394
        %vm396 = vcmask 326912
        %v397 = vsel %vm396, %v395, %v393
        %v398 = vadd.s32 %v380, 4294967256
        %v399 = vperm.slane %v340, %v398
        %vm400 = vcmask 392512
        %v401 = vsel %vm400, %v399, %v397
        %v402 = vadd.s32 %v380, 4294967248
        %v403 = vperm.slane %v341, %v402
        %vm404 = vcmask 458112
        %v405 = vsel %vm404, %v403, %v401
        %v406 = vadd.s32 %v380, 4294967240
        %v407 = vperm.slane %v342, %v406
        %vm408 = vcmask 523712
        %v409 = vsel %vm408, %v407, %v405
        %v410 = vperm.slane %v343, %v380
        %v411 = vperm.slane %v344, %v382
        %v412 = vsel %vm384, %v411, %v410
        %v413 = vperm.slane %v345, %v386
        %v414 = vsel %vm388, %v413, %v412
        %v415 = vperm.slane %v346, %v390
        %v416 = vsel %vm392, %v415, %v414
        %v417 = vperm.slane %v347, %v394
        %v418 = vsel %vm396, %v417, %v416
        %v419 = vperm.slane %v348, %v398
        %v420 = vsel %vm400, %v419, %v418
        %v421 = vperm.slane %v349, %v402
        %v422 = vsel %vm404, %v421, %v420
        %v423 = vperm.slane %v350, %v406
        %v424 = vsel %vm408, %v423, %v422
        %vm425 = vcmask 1041409
        %v426 = vsel %vm425, %v424, %v409
        %vm427 = vcmask 523264
        %v428 = vsel %vm427, %v426, 0
        %430 = vmatpush.msra.mxu0 0.0
        %431 = vmatpush.msra.mxu0 0.0
        %432 = vmatpush.msra.mxu0 0.0
        %433 = vmatpush.msra.mxu0 0.0
        %434 = vmatpush.msra.mxu0 0.0
        %435 = vmatpush.msra.mxu0 0.0
        %436 = vmatpush.msra.mxu0 0.0
        %437 = vmatpush.msra.mxu0 0.0
        %438 = vmatpush.msra.mxu0 %v358
        %439 = vmatpush.msra.mxu0 %v357
        %440 = vmatpush.msra.mxu0 %v356
        %441 = vmatpush.msra.mxu0 %v355
        %442 = vmatpush.msra.mxu0 %v354
        %443 = vmatpush.msra.mxu0 %v353
        %444 = vmatpush.msra.mxu0 %v352
        %445 = vmatpush.msra.mxu0 %v351
        %446 = vmatmul.f32.gmra.mxu0 %v428
        %v447 = vpop.f32.mrf.mxu0
        %v448 = vadd.f32 %v361, %v447
        %449 = vdwg.mxu0
        %v450 = vmax.f32 %v448, 0.0
        %v451 = vld [vmem:[%s3] sm:$0xf]
        %v452 = vld [vmem:[%s4] sm:$0x1]
        %v454 = vperm.slane %v452, 0
        %vm456 = vcmask 31744
        %v458 = vsel %vm456, %v450, 0
        %vm460 = vcmask 1043456
        %v462 = vsel %vm460, %v451, 0
        %464 = vmatpush.msra.mxu0 0.0
        %465 = vmatpush.msra.mxu0 0.0
        %466 = vmatpush.msra.mxu0 0.0
        %467 = vmatpush.msra.mxu0 0.0
        %468 = vmatpush.msra.mxu0 0.0
        %469 = vmatpush.msra.mxu0 0.0
        %470 = vmatpush.msra.mxu0 0.0
        %471 = vmatpush.msra.mxu0 0.0
        %472 = vmatpush.msra.mxu0 0.0
        %473 = vmatpush.msra.mxu0 0.0
        %474 = vmatpush.msra.mxu0 0.0
        %475 = vmatpush.msra.mxu0 0.0
        %476 = vmatpush.msra.mxu0 0.0
        %477 = vmatpush.msra.mxu0 0.0
        %478 = vmatpush.msra.mxu0 0.0
        %479 = vmatpush.msra.mxu0 %v462
        %480 = vmatmul.f32.gmra.mxu0 %v458
        %v481 = vpop.f32.mrf.mxu0
        %v482 = vadd.f32 %v454, %v481
        %483 = vdwg.mxu0
        %v484 = vxor.u32 %v482, 2147483648
        %v485 = vmul.f32 %v484, 1.442695
        %v486 = vpow.pop %v485
        %v487 = vadd.f32 %v486, 1.0
        %v488 = vrcp.pop %v487
        %v489 = vmul.f32 %v487, %v488
        %v490 = vsub.f32 1.0, %v489
        %v491 = vmul.f32 %v488, %v490
        %v492 = vadd.f32 %v488, %v491
        %vm493 = vweird.f32 %v487
        %vm494 = vweird.f32 %v488
        %vm495 = vmor %vm493, %vm494
        %v496 = vsel %vm495, %v488, %v492
        %v497 = vand.u32 2147483647, %v487
        %vm498 = vcmp.eq.f32.partialorder %v497, 8.507059e+37
        %v499 = vand.u32 %v487, 2147483648
        %v500 = vor.u32 1.1754944e-38, %v499
        %v501 = vsel %vm498, %v500, %v496
        %v502 = vmul.f32 1.0, %v501
        %v503 = vperm.slane %v502, 0
        %v504 = vlaneseq
        %v505 = vshrl.u32 %v504, 7
        %507 = vset.pattern.permute.xlu0 %v505
        %508 = vperm.xlu0 %507, %v503
        %v509 = vpop.permute.xlu0 %508
        %v510 = vlaneseq
        %v511 = vshrl.u32 %v510, 7
        %v512 = vadd.s32 %v511, 8
        %513 = vset.pattern.permute.xlu0 %v512
        %514 = vperm.xlu0 %513, %v503
        %v515 = vpop.permute.xlu0 %514
        %v516 = vlaneseq
        %v517 = vshrl.u32 %v516, 7
        %v518 = vadd.s32 %v517, 16
        %519 = vset.pattern.permute.xlu0 %v518
        %520 = vperm.xlu0 %519, %v503
        %v521 = vpop.permute.xlu0 %520
        %v522 = vlaneseq
        %v523 = vshrl.u32 %v522, 7
        %v524 = vadd.s32 %v523, 24
        %525 = vset.pattern.permute.xlu0 %v524
        %526 = vperm.xlu0 %525, %v503
        %v527 = vpop.permute.xlu0 %526
        %v528 = vlaneseq
        %v529 = vshrl.u32 %v528, 7
        %v530 = vadd.s32 %v529, 32
        %531 = vset.pattern.permute.xlu0 %v530
        %532 = vperm.xlu0 %531, %v503
        %v533 = vpop.permute.xlu0 %532
        %v534 = vlaneseq
        %v535 = vshrl.u32 %v534, 7
        %v536 = vadd.s32 %v535, 40
        %537 = vset.pattern.permute.xlu0 %v536
        %538 = vperm.xlu0 %537, %v503
        %v539 = vpop.permute.xlu0 %538
        %v540 = vlaneseq
        %v541 = vshrl.u32 %v540, 7
        %v542 = vadd.s32 %v541, 48
        %543 = vset.pattern.permute.xlu0 %v542
        %544 = vperm.xlu0 %543, %v503
        %v545 = vpop.permute.xlu0 %544
        %v546 = vlaneseq
        %v547 = vshrl.u32 %v546, 7
        %v548 = vadd.s32 %v547, 56
        %549 = vset.pattern.permute.xlu0 %v548
        %550 = vperm.xlu0 %549, %v503
        %v551 = vpop.permute.xlu0 %550
        %v552 = vperm.slane %v502, 1
        %v553 = vlaneseq
        %v554 = vshrl.u32 %v553, 7
        %556 = vset.pattern.permute.xlu0 %v554
        %557 = vperm.xlu0 %556, %v552
        %v558 = vpop.permute.xlu0 %557
        %v559 = vlaneseq
        %v560 = vshrl.u32 %v559, 7
        %v561 = vadd.s32 %v560, 8
        %562 = vset.pattern.permute.xlu0 %v561
        %563 = vperm.xlu0 %562, %v552
        %v564 = vpop.permute.xlu0 %563
        %v565 = vlaneseq
        %v566 = vshrl.u32 %v565, 7
        %v567 = vadd.s32 %v566, 16
        %568 = vset.pattern.permute.xlu0 %v567
        %569 = vperm.xlu0 %568, %v552
        %v570 = vpop.permute.xlu0 %569
        %v571 = vlaneseq
        %v572 = vshrl.u32 %v571, 7
        %v573 = vadd.s32 %v572, 24
        %574 = vset.pattern.permute.xlu0 %v573
        %575 = vperm.xlu0 %574, %v552
        %v576 = vpop.permute.xlu0 %575
        %v577 = vlaneseq
        %v578 = vshrl.u32 %v577, 7
        %v579 = vadd.s32 %v578, 32
        %580 = vset.pattern.permute.xlu0 %v579
        %581 = vperm.xlu0 %580, %v552
        %v582 = vpop.permute.xlu0 %581
        %v583 = vlaneseq
        %v584 = vshrl.u32 %v583, 7
        %v585 = vadd.s32 %v584, 40
        %586 = vset.pattern.permute.xlu0 %v585
        %587 = vperm.xlu0 %586, %v552
        %v588 = vpop.permute.xlu0 %587
        %v589 = vlaneseq
        %v590 = vshrl.u32 %v589, 7
        %v591 = vadd.s32 %v590, 48
        %592 = vset.pattern.permute.xlu0 %v591
        %593 = vperm.xlu0 %592, %v552
        %v594 = vpop.permute.xlu0 %593
        %v595 = vlaneseq
        %v596 = vshrl.u32 %v595, 7
        %v597 = vadd.s32 %v596, 56
        %598 = vset.pattern.permute.xlu0 %v597
        %599 = vperm.xlu0 %598, %v552
        %v600 = vpop.permute.xlu0 %599
        %v601 = vmul.f32 %v248, %v509
        %v602 = vmul.f32 %v249, %v509
        %v603 = vmul.f32 %v250, %v515
        %v604 = vmul.f32 %v251, %v515
        %v605 = vmul.f32 %v252, %v521
        %v606 = vmul.f32 %v253, %v521
        %v607 = vmul.f32 %v254, %v527
        %v608 = vmul.f32 %v255, %v527
        %v609 = vmul.f32 %v256, %v533
        %v610 = vmul.f32 %v257, %v533
        %v611 = vmul.f32 %v258, %v539
        %v612 = vmul.f32 %v259, %v539
        %v613 = vmul.f32 %v260, %v545
        %v614 = vmul.f32 %v261, %v545
        %v615 = vmul.f32 %v262, %v551
        %v616 = vmul.f32 %v263, %v551
        %v617 = vmul.f32 %v264, %v558
        %v618 = vmul.f32 %v265, %v558
        %v619 = vmul.f32 %v266, %v564
        %v620 = vmul.f32 %v267, %v564
        %v621 = vmul.f32 %v268, %v570
        %v622 = vmul.f32 %v269, %v570
        %v623 = vmul.f32 %v270, %v576
        %v624 = vmul.f32 %v271, %v576
        %v625 = vmul.f32 %v272, %v582
        %v626 = vmul.f32 %v273, %v582
        %v627 = vmul.f32 %v274, %v588
        %v628 = vmul.f32 %v275, %v588
        %v629 = vmul.f32 %v276, %v594
        %v630 = vmul.f32 %v277, %v594
        %v631 = vmul.f32 %v278, %v600
        %v632 = vmul.f32 %v279, %v600
        %633 = vst [vmem:[%s245] sm:$0xff] %v601
        %634 = vst [vmem:[%s245 + $0x8] sm:$0xff] %v602
        %635 = vst [vmem:[%s245 + $0x10] sm:$0xff] %v603
        %636 = vst [vmem:[%s245 + $0x18] sm:$0xff] %v604
        %637 = vst [vmem:[%s245 + $0x20] sm:$0xff] %v605
        %638 = vst [vmem:[%s245 + $0x28] sm:$0xff] %v606
        %639 = vst [vmem:[%s245 + $0x30] sm:$0xff] %v607
        %640 = vst [vmem:[%s245 + $0x38] sm:$0xff] %v608
        %641 = vst [vmem:[%s245 + $0x40] sm:$0xff] %v609
        %642 = vst [vmem:[%s245 + $0x48] sm:$0xff] %v610
        %643 = vst [vmem:[%s245 + $0x50] sm:$0xff] %v611
        %644 = vst [vmem:[%s245 + $0x58] sm:$0xff] %v612
        %645 = vst [vmem:[%s245 + $0x60] sm:$0xff] %v613
        %646 = vst [vmem:[%s245 + $0x68] sm:$0xff] %v614
        %647 = vst [vmem:[%s245 + $0x70] sm:$0xff] %v615
        %648 = vst [vmem:[%s245 + $0x78] sm:$0xff] %v616
        %649 = vst [vmem:[%s245 + $0x80] sm:$0xff] %v617
        %650 = vst [vmem:[%s245 + $0x88] sm:$0xff] %v618
        %651 = vst [vmem:[%s245 + $0x90] sm:$0xff] %v619
        %652 = vst [vmem:[%s245 + $0x98] sm:$0xff] %v620
        %653 = vst [vmem:[%s245 + $0xa0] sm:$0xff] %v621
        %654 = vst [vmem:[%s245 + $0xa8] sm:$0xff] %v622
        %655 = vst [vmem:[%s245 + $0xb0] sm:$0xff] %v623
        %656 = vst [vmem:[%s245 + $0xb8] sm:$0xff] %v624
        %657 = vst [vmem:[%s245 + $0xc0] sm:$0xff] %v625
        %658 = vst [vmem:[%s245 + $0xc8] sm:$0xff] %v626
        %659 = vst [vmem:[%s245 + $0xd0] sm:$0xff] %v627
        %660 = vst [vmem:[%s245 + $0xd8] sm:$0xff] %v628
        %661 = vst [vmem:[%s245 + $0xe0] sm:$0xff] %v629
        %662 = vst [vmem:[%s245 + $0xe8] sm:$0xff] %v630
        %663 = vst [vmem:[%s245 + $0xf0] sm:$0xff] %v631
        %664 = vst [vmem:[%s245 + $0xf8] sm:$0xff] %v632
        %s665 = sand.u32 %s140, 1
        %s666 = scalar_lea.sflag [#allocation4], %s665
        %s667 = sand.u32 %s140, 1
        %s668 = smul.addr %s667, 256
        %s669 = scalar_lea.vmem [#allocation5], %s668
        // Predicated region
        $region45: #{tpu_custom_call.1} parent=39 // pred_check
          %p670 = pneg %p150
        $region46: #{tpu_custom_call.1} parent=39 // pred_check_branch
          %672 = sbr.rel (%p670) target = $region48
        $region47: #{tpu_custom_call.1} parent=39 // pred_region
          %s673 = smul.u32 2, %s22
          %675 = vsyncadd %s666, 0
          %s676 = smul.addr %s673, 16
          %s677 = smul.addr %s676, 8
          %s678 = scalar_lea.hbm %s5, %s677
          %s679 = sshll.u32 %s669, 4
          %s680 = int_to_ptr.vmem [resolvable:$true] %s679
          %s681 = sshll.u32 %s678, 4
          %s682 = int_to_ptr.hbm [resolvable:$true] %s681
          %687 = dma.vmem_to_hbm [thread:$0]  %s680, 4096, %s682, %s666, 256, 256, 16
        $region48: #{tpu_custom_call.1} parent=39 // pred_fallthru
          _
      $region40: #{tpu_custom_call.1} parent=5 // pred_fallthru
        _
      %p688 = scmp.le.s32.totalorder 2, %s17
      // Predicated region
      $region49: #{tpu_custom_call.1} parent=5 // pred_check
        %p689 = pneg %p688
      $region50: #{tpu_custom_call.1} parent=5 // pred_check_branch
        %691 = sbr.rel (%p689) target = $region52
      $region51: #{tpu_custom_call.1} parent=5 // pred_region
        %s692 = ssub.s32 %s17, 2
        // Predicated region
        $region53: #{tpu_custom_call.1} parent=51 // pred_check
          %p693 = pneg %p156
        $region54: #{tpu_custom_call.1} parent=51 // pred_check_branch
          %695 = sbr.rel (%p693) target = $region56
        $region55: #{tpu_custom_call.1} parent=51 // pred_region
          %s696 = sand.u32 %s141, 1
          %s697 = scalar_lea.sflag [#allocation4], %s696
          %s698 = sand.u32 %s141, 1
          %s699 = smul.addr %s698, 256
          %s700 = scalar_lea.vmem [#allocation5], %s699
          %702 = dma.done %s697, 4096
        $region56: #{tpu_custom_call.1} parent=51 // pred_fallthru
          _
      $region52: #{tpu_custom_call.1} parent=5 // pred_fallthru
        _
    $region6: #{tpu_custom_call.1} parent=1 // loop_footer
      %s21 = sadd.s32 1, %s17
    $region7: #{tpu_custom_call.1} parent=1 // loop_footer_branch
      %16 = sbr.rel target = $region3
    $region8: #{tpu_custom_call.1} parent=1 // loop_exit
      _
    %703 = vsyncpa [#allocation3], 1
    %s704 = scalar_lea.sflag [#allocation3], 1
    %705 = vsyncpa %s704, 1
    %706 = vsyncpa [#allocation4], 1
    %s707 = scalar_lea.sflag [#allocation4], 1
    %708 = vsyncpa %s707, 1

</llo_original>
